<compile_context>
chip_gen: v5e
topology: v5e:2x2
jax: 0.10.0
libtpu: 0.0.40
codegen_flags: <defaults>
</compile_context>

<pallas_src>
import functools

import numpy as np

import jax
import jax.numpy as jnp
from jax.experimental import pallas as pl
from jax.experimental.pallas import tpu as pltpu


_MIB = 1024 * 1024


def _vmem_limit(bytes_needed):
    """Scoped-VMEM limit: 2x headroom over the estimated footprint, clamped to
    [16 MiB, ~60% of the chip's reported VMEM] (safe on v7x 64 MiB/TC)."""
    try:
        cap = int(pltpu.get_tpu_info().vmem_capacity_bytes)
    except Exception:
        cap = 64 * _MIB
    hi = max(16 * _MIB, int(0.6 * cap))
    return int(min(max(2 * int(bytes_needed), 16 * _MIB), hi))


def _upsample_matrix(L):
    """(2L, L) bilinear interpolation matrix, scale=2, align_corners=True."""
    L2 = 2 * L
    i = jnp.arange(L2, dtype=jnp.float32)
    if L > 1:
        src = i * (L - 1) / (L2 - 1)
    else:
        src = jnp.zeros_like(i)
    lo = jnp.clip(jnp.floor(src), 0, L - 1).astype(jnp.int32)
    hi = jnp.minimum(lo + 1, L - 1)
    frac = src - lo.astype(jnp.float32)
    rows = jnp.arange(L2)
    U = jnp.zeros((L2, L), jnp.float32)
    U = U.at[rows, lo].add(1.0 - frac)
    U = U.at[rows, hi].add(frac)
    return U


# --------------------------- Kernel 1: upsample ----------------------------


def _upsample_blockdiag_kernel(x_ref, uwt_ref, uhb_ref, o_ref):
    # x_ref: (1, Cin*H, W), uwt_ref: (W, 2W), uhb_ref: (Cin*2H, Cin*H) = kron(I, Uh),
    # o_ref: (1, Cin*2H, 2W).  One width matmul + one block-diagonal height matmul.
    t = jnp.dot(x_ref[0], uwt_ref[...], preferred_element_type=jnp.float32)
    o_ref[0] = jnp.dot(uhb_ref[...], t,
                       preferred_element_type=jnp.float32).astype(o_ref.dtype)


def _upsample_perchannel_kernel(x_ref, uwt_ref, uh_ref, o_ref, *, Cin, H, H2):
    # Fallback for large Cin*H: per-channel (2H,H)@(H,2W), each result stored
    # directly into its output slice (no concatenate, no extra temporary).
    t = jnp.dot(x_ref[0], uwt_ref[...], preferred_element_type=jnp.float32)
    for c in range(Cin):                                   # static -> unrolled
        o_ref[0, c * H2:(c + 1) * H2, :] = jnp.dot(
            uh_ref[...], t[c * H:(c + 1) * H, :],
            preferred_element_type=jnp.float32).astype(o_ref.dtype)


# --------------------- Kernel 2: 3x3 conv + bias + ReLU ---------------------


def _edge_masks(H2, W2):
    """Four boundary predicates over the flattened (1, H2*W2) lane axis."""
    P2 = H2 * W2
    p = jax.lax.broadcasted_iota(jnp.int32, (1, P2), 1)
    gy = p // W2
    gx = p - gy * W2
    return gy >= 1, gy <= H2 - 2, gx >= 1, gx <= W2 - 2


def _tap_mask(dy, dx, top, bot, left, right):
    """Validity mask for tap (dy, dx); only the checks this tap needs."""
    m = None
    if dy < 0:
        m = top
    elif dy > 0:
        m = bot
    if dx < 0:
        m = left if m is None else (m & left)
    elif dx > 0:
        m = right if m is None else (m & right)
    return m            # None for the center tap (no mask, no roll)


def _conv_im2col_kernel(u_ref, w_ref, o_ref, col_ref, *, Cin, Cin_pad, H2, W2):
    # u_ref: (1, Cin, P2); w_ref: (Cout, 9*Cin_pad + 1) with bias in the last
    # column; o_ref: (1, Cout, P2); col_ref: VMEM scratch (9*Cin_pad + 1, P2).
    # P2 = H2*W2 flattened row-major (gy*W2 + gx) -> lane-dense output.
    P2 = H2 * W2
    u = u_ref[0]                                            # (Cin, P2)
    top, bot, left, right = _edge_masks(H2, W2)

    for t in range(9):                                      # static -> unrolled
        dy, dx = t // 3 - 1, t % 3 - 1
        off = dy * W2 + dx
        # shifted[p] = u[p + off]; wrap-around lanes are zeroed by the mask.
        sh = u if off == 0 else pltpu.roll(u, (-off) % P2, axis=1)
        m = _tap_mask(dy, dx, top, bot, left, right)
        piece = sh if m is None else jnp.where(m, sh, 0.0)
        # Aligned sublane slot (Cin_pad % 8 == 0) -> no retile copies.
        col_ref[t * Cin_pad:t * Cin_pad + Cin, :] = piece
        if Cin_pad > Cin:   # zero the padded rows (their weight columns are 0)
            col_ref[t * Cin_pad + Cin:(t + 1) * Cin_pad, :] = jnp.zeros(
                (Cin_pad - Cin, P2), col_ref.dtype)
    # Ones row so the bias column of w folds the bias into the matmul.
    col_ref[9 * Cin_pad:9 * Cin_pad + 1, :] = jnp.ones((1, P2), col_ref.dtype)

    acc = jnp.dot(w_ref[...], col_ref[...], preferred_element_type=jnp.float32)
    o_ref[0] = jnp.maximum(acc, 0.0).astype(o_ref.dtype)


def _conv_accum_kernel(u_ref, w_ref, b_ref, o_ref, *, Cin, Cout, H2, W2):
    # Per-tap accumulation path (large Cin): no 9x im2col materialization.
    # u_ref: (1, Cin, P2); w_ref: (Cout, 9*Cin); b_ref: (Cout, 1).
    P2 = H2 * W2
    u = u_ref[0]                                            # (Cin, P2)
    top, bot, left, right = _edge_masks(H2, W2)

    mask_result = Cout <= Cin        # mask whichever side is cheaper
    acc = jnp.broadcast_to(b_ref[...], (Cout, P2)).astype(jnp.float32)
    for t in range(9):
        dy, dx = t // 3 - 1, t % 3 - 1
        off = dy * W2 + dx
        sh = u if off == 0 else pltpu.roll(u, (-off) % P2, axis=1)
        m = _tap_mask(dy, dx, top, bot, left, right)
        if m is not None and not mask_result:
            sh = jnp.where(m, sh, 0.0)
        contrib = jnp.dot(w_ref[:, t * Cin:(t + 1) * Cin], sh,
                          preferred_element_type=jnp.float32)   # (Cout, P2)
        if m is not None and mask_result:
            contrib = jnp.where(m, contrib, 0.0)
        acc = acc + contrib
    o_ref[0] = jnp.maximum(acc, 0.0).astype(o_ref.dtype)


# -------------------------------- Wrapper -----------------------------------


def scale_up_forward(x_nchw, weight, bias, *, interm_dtype=None,
                     up_mode=None, conv_mode=None):
    """Pallas implementation of ScaleUp.forward.

    x_nchw: (N, Cin, H, W); weight: (Cout, Cin, 3, 3); bias: (Cout,).
    interm_dtype: dtype of the upsampled intermediate written to HBM between
      the two kernels (e.g. jnp.bfloat16 to halve that traffic); default is
      the input dtype.
    up_mode / conv_mode: force a code path ("blockdiag"/"perchan",
      "im2col"/"accum"); None picks automatically.
    """
    N, Cin, H, W = x_nchw.shape
    Cout = weight.shape[0]
    H2, W2 = 2 * H, 2 * W
    P2 = H2 * W2
    f32 = jnp.float32
    cdt = np.dtype(x_nchw.dtype if interm_dtype is None else interm_dtype)
    out_dtype = x_nchw.dtype
    c_isz = cdt.itemsize
    o_isz = np.dtype(out_dtype).itemsize
    x_isz = np.dtype(x_nchw.dtype).itemsize

    # ---- Kernel 1: separable bilinear x2 upsample (channel-major layout). ---
    uh = _upsample_matrix(H)                                # (2H, H), f32
    uwt = _upsample_matrix(W).T                             # (W, 2W), f32
    x3 = x_nchw.reshape(N, Cin * H, W)                      # free reshape of NCHW

    if up_mode is None:
        up_mode = "blockdiag" if Cin * H <= 512 else "perchan"
    if up_mode == "blockdiag":
        hmat = jnp.kron(jnp.eye(Cin, dtype=f32), uh)        # (Cin*2H, Cin*H)
        k1 = _upsample_blockdiag_kernel
        k1_flops = 2 * N * (Cin * H * W * W2 + Cin * H2 * Cin * H * W2)
    else:
        hmat = uh
        k1 = functools.partial(_upsample_perchannel_kernel, Cin=Cin, H=H, H2=H2)
        k1_flops = 2 * N * (Cin * H * W * W2 + Cin * H2 * H * W2)

    k1_bytes = (N * Cin * H * W * x_isz + N * Cin * P2 * c_isz
                + 4 * (int(uwt.size) + int(hmat.size)))
    k1_foot = (2 * Cin * H * W * x_isz + 2 * Cin * P2 * c_isz
               + 2 * 4 * (int(uwt.size) + int(hmat.size))
               + 4 * Cin * H * W2 + 4 * Cin * P2)
    up = pl.pallas_call(
        k1,
        out_shape=jax.ShapeDtypeStruct((N, Cin * H2, W2), cdt),
        grid_spec=pltpu.PrefetchScalarGridSpec(
            num_scalar_prefetch=0,
            grid=(N,),
            in_specs=[
                pl.BlockSpec((1, Cin * H, W), lambda n: (n, 0, 0)),
                pl.BlockSpec((W, W2), lambda n: (0, 0)),
                pl.BlockSpec(hmat.shape, lambda n: (0, 0)),
            ],
            out_specs=pl.BlockSpec((1, Cin * H2, W2), lambda n: (n, 0, 0)),
        ),
        compiler_params=pltpu.CompilerParams(
            dimension_semantics=("parallel",),
            vmem_limit_bytes=_vmem_limit(k1_foot)),
        cost_estimate=pl.CostEstimate(flops=int(k1_flops), transcendentals=0,
                                      bytes_accessed=int(k1_bytes)),
    )(x3, uwt, hmat)

    # Free HBM-level reshape: (N, Cin*2H, 2W) -> (N, Cin, 4HW).  This is the
    # sublane->lane flatten the conv kernel needs, with zero data movement.
    up_flat = up.reshape(N, Cin, P2)

    # ---- Kernel 2: fused 3x3 conv (pad=1) + bias + ReLU, lane-dense output. --
    w4 = jnp.transpose(weight, (0, 2, 3, 1)).astype(f32)    # (Cout, 3, 3, Cin)
    Cin_pad = ((Cin + 7) // 8) * 8
    K = 9 * Cin_pad + 1                                     # + folded-bias row
    if conv_mode is None:
        conv_mode = ("im2col"
                     if (Cin < 64 and K * P2 * c_isz <= 12 * _MIB) else "accum")

    k2_flops = 2 * N * Cout * 9 * Cin * P2
    k2_bytes = (N * Cin * P2 * c_isz + N * Cout * P2 * o_isz
                + 4 * Cout * (9 * Cin + 1))

    if conv_mode == "im2col":
        wmat = jnp.pad(w4, ((0, 0), (0, 0), (0, 0), (0, Cin_pad - Cin)))
        wmat = wmat.reshape(Cout, 9 * Cin_pad)
        wmat = jnp.concatenate(
            [wmat, bias.reshape(Cout, 1).astype(f32)], axis=1).astype(cdt)
        k2 = functools.partial(_conv_im2col_kernel, Cin=Cin, Cin_pad=Cin_pad,
                               H2=H2, W2=W2)
        k2_foot = (2 * Cin * P2 * c_isz + 2 * Cout * P2 * o_isz
                   + 2 * Cout * K * c_isz + K * P2 * c_isz
                   + 2 * Cin * P2 * c_isz + 4 * Cout * P2)
        out_flat = pl.pallas_call(
            k2,
            out_shape=jax.ShapeDtypeStruct((N, Cout, P2), out_dtype),
            grid_spec=pltpu.PrefetchScalarGridSpec(
                num_scalar_prefetch=0,
                grid=(N,),
                in_specs=[
                    pl.BlockSpec((1, Cin, P2), lambda n: (n, 0, 0)),
                    pl.BlockSpec((Cout, K), lambda n: (0, 0)),
                ],
                out_specs=pl.BlockSpec((1, Cout, P2), lambda n: (n, 0, 0)),
                scratch_shapes=[pltpu.VMEM((K, P2), cdt)],
            ),
            compiler_params=pltpu.CompilerParams(
                dimension_semantics=("parallel",),
                vmem_limit_bytes=_vmem_limit(k2_foot)),
            cost_estimate=pl.CostEstimate(flops=int(k2_flops),
                                          transcendentals=0,
                                          bytes_accessed=int(k2_bytes)),
        )(up_flat, wmat)
    else:  # per-tap accumulation path
        wmat = w4.reshape(Cout, 9 * Cin).astype(cdt)
        b2 = bias.reshape(Cout, 1).astype(f32)
        k2 = functools.partial(_conv_accum_kernel, Cin=Cin, Cout=Cout,
                               H2=H2, W2=W2)
        k2_foot = (2 * Cin * P2 * c_isz + 2 * Cout * P2 * o_isz
                   + 2 * Cout * 9 * Cin * c_isz + 2 * Cin * P2 * c_isz
                   + 2 * Cout * P2 * 4)
        out_flat = pl.pallas_call(
            k2,
            out_shape=jax.ShapeDtypeStruct((N, Cout, P2), out_dtype),
            grid_spec=pltpu.PrefetchScalarGridSpec(
                num_scalar_prefetch=0,
                grid=(N,),
                in_specs=[
                    pl.BlockSpec((1, Cin, P2), lambda n: (n, 0, 0)),
                    pl.BlockSpec((Cout, 9 * Cin), lambda n: (0, 0)),
                    pl.BlockSpec((Cout, 1), lambda n: (0, 0)),
                ],
                out_specs=pl.BlockSpec((1, Cout, P2), lambda n: (n, 0, 0)),
            ),
            compiler_params=pltpu.CompilerParams(
                dimension_semantics=("parallel",),
                vmem_limit_bytes=_vmem_limit(k2_foot)),
            cost_estimate=pl.CostEstimate(flops=int(k2_flops),
                                          transcendentals=0,
                                          bytes_accessed=int(k2_bytes)),
        )(up_flat, wmat, b2)

    # Free reshape back to NCHW: (N, Cout, 4HW) -> (N, Cout, 2H, 2W).
    return out_flat.reshape(N, Cout, H2, W2)


# ------------------------------- Reference ----------------------------------


def _reference(x_nchw, weight, bias):
    """Pure-JAX reference (gather-based bilinear + lax conv, HIGHEST precision)."""
    N, C, H, W = x_nchw.shape
    H2, W2 = 2 * H, 2 * W

    def coords(L, L2):
        i = jnp.arange(L2, dtype=jnp.float32)
        src = i * (L - 1) / (L2 - 1) if L > 1 else jnp.zeros_like(i)
        lo = jnp.clip(jnp.floor(src), 0, L - 1).astype(jnp.int32)
        hi = jnp.minimum(lo + 1, L - 1)
        f = src - lo.astype(jnp.float32)
        return lo, hi, f

    hlo, hhi, hf = coords(H, H2)
    wlo, whi, wf = coords(W, W2)
    rows = (x_nchw[:, :, hlo, :] * (1.0 - hf)[None, None, :, None]
            + x_nchw[:, :, hhi, :] * hf[None, None, :, None])
    up = (rows[:, :, :, wlo] * (1.0 - wf)[None, None, None, :]
          + rows[:, :, :, whi] * wf[None, None, None, :])
    conv = jax.lax.conv_general_dilated(
        up, weight, window_strides=(1, 1), padding="SAME",
        dimension_numbers=("NCHW", "OIHW", "NCHW"),
        precision=jax.lax.Precision.HIGHEST)
    conv = conv + bias[None, :, None, None]
    return jnp.maximum(conv, 0.0)


if __name__ == "__main__":
    key = jax.random.PRNGKey(0)
    kx, kw, kb, kx2, kw2 = jax.random.split(key, 5)

    # --- Test 1: default paths (block-diag upsample + fused im2col conv). ---
    N, Cin, Cout, H, W = 2, 4, 8, 16, 16
    x = jax.random.normal(kx, (N, Cin, H, W), jnp.float32)
    # kaiming_normal_-style weight (fan_in mode, gain=sqrt(2)); a small nonzero
    # bias so the folded-bias path is actually exercised.
    fan_in = Cin * 3 * 3
    weight = jax.random.normal(kw, (Cout, Cin, 3, 3), jnp.float32) * jnp.sqrt(
        2.0 / fan_in)
    bias = 0.1 * jax.random.normal(kb, (Cout,), jnp.float32)

    out = jax.block_until_ready(scale_up_forward(x, weight, bias))
    ref = _reference(x, weight, bias)
    assert out.shape == (N, Cout, 2 * H, 2 * W), out.shape
    if not jnp.allclose(out, ref, atol=5e-5, rtol=5e-5):
        raise AssertionError(
            "im2col path mismatch, max abs err = "
            f"{float(jnp.max(jnp.abs(out - ref)))}")

    # --- Test 2: exercise the alternate code paths (per-channel upsample +
    #     per-tap accumulation conv) on a second small shape. ---
    N2, Ci2, Co2, Hs, Ws = 1, 8, 4, 8, 8
    x2 = jax.random.normal(kx2, (N2, Ci2, Hs, Ws), jnp.float32)
    w2 = jax.random.normal(kw2, (Co2, Ci2, 3, 3), jnp.float32) * jnp.sqrt(
        2.0 / (Ci2 * 9))
    b2 = jnp.linspace(-0.2, 0.2, Co2, dtype=jnp.float32)
    out2 = jax.block_until_ready(
        scale_up_forward(x2, w2, b2, up_mode="perchan", conv_mode="accum"))
    ref2 = _reference(x2, w2, b2)
    if not jnp.allclose(out2, ref2, atol=5e-5, rtol=5e-5):
        raise AssertionError(
            "accum path mismatch, max abs err = "
            f"{float(jnp.max(jnp.abs(out2 - ref2)))}")

    print("KERNEL_OK")
</pallas_src>

<mosaic_0001>
module attributes {stable_mosaic.version = 11 : i64} {
  func.func @_upsample_blockdiag_kernel(%arg0: i32, %arg1: memref<1x64x16xf32, #tpu.memory_space<vmem>>, %arg2: memref<16x32xf32, #tpu.memory_space<vmem>>, %arg3: memref<128x64xf32, #tpu.memory_space<vmem>>, %arg4: memref<1x128x32xf32, #tpu.memory_space<vmem>>) attributes {dimension_semantics = [#tpu.dimension_semantics<parallel>], iteration_bounds = array<i64: 2>, scalar_prefetch = 0 : i64, scratch_operands = 0 : i64, tpu.core_type = #tpu.core_type<tc>, window_params = [{transform_indices = @transform_0, window_bounds = array<i64: 1, 64, 16>}, {pipeline_mode = #tpu.pipeline_mode<synchronous>, transform_indices = @transform_1, window_bounds = array<i64: 16, 32>}, {pipeline_mode = #tpu.pipeline_mode<synchronous>, transform_indices = @transform_2, window_bounds = array<i64: 128, 64>}, {transform_indices = @transform_3, window_bounds = array<i64: 1, 128, 32>}]} {
    %c0 = arith.constant 0 : index
    %c0_0 = arith.constant 0 : index
    %c0_1 = arith.constant 0 : index
    %0 = vector.load %arg1[%c0, %c0_0, %c0_1] : memref<1x64x16xf32, #tpu.memory_space<vmem>>, vector<1x64x16xf32>
    %1 = vector.shape_cast %0 : vector<1x64x16xf32> to vector<64x16xf32>
    %c0_2 = arith.constant 0 : index
    %c0_3 = arith.constant 0 : index
    %2 = vector.load %arg2[%c0_2, %c0_3] : memref<16x32xf32, #tpu.memory_space<vmem>>, vector<16x32xf32>
    %cst = arith.constant dense<0.000000e+00> : vector<64x32xf32>
    %3 = tpu.matmul %1, %2, %cst {dimension_numbers = #tpu.dot_dimension_numbers<[1], [0], [0], [1], [0, 0, 1, 1], [], []>} : vector<64x16xf32>, vector<16x32xf32>, vector<64x32xf32> -> vector<64x32xf32>
    %c0_4 = arith.constant 0 : index
    %c0_5 = arith.constant 0 : index
    %4 = vector.load %arg3[%c0_4, %c0_5] : memref<128x64xf32, #tpu.memory_space<vmem>>, vector<128x64xf32>
    %cst_6 = arith.constant dense<0.000000e+00> : vector<128x32xf32>
    %5 = tpu.matmul %4, %3, %cst_6 {dimension_numbers = #tpu.dot_dimension_numbers<[1], [0], [0], [1], [0, 0, 1, 1], [], []>} : vector<128x64xf32>, vector<64x32xf32>, vector<128x32xf32> -> vector<128x32xf32>
    %c0_7 = arith.constant 0 : index
    %c0_8 = arith.constant 0 : index
    %c0_9 = arith.constant 0 : index
    %6 = vector.load %arg4[%c0_7, %c0_8, %c0_9] : memref<1x128x32xf32, #tpu.memory_space<vmem>>, vector<1x128x32xf32>
    %7 = vector.shape_cast %6 : vector<1x128x32xf32> to vector<128x32xf32>
    %8 = vector.shape_cast %5 : vector<128x32xf32> to vector<1x128x32xf32>
    tpu.vector_store %arg4[%c0_7, %c0_8, %c0_9], %8 {strides = array<i32>} : memref<1x128x32xf32, #tpu.memory_space<vmem>>, vector<1x128x32xf32>,
    return
  }
  func.func @transform_0(%arg0: i32) -> (i32, i32, i32) {
    %c0_i32 = arith.constant 0 : i32
    %c0_i32_0 = arith.constant 0 : i32
    %c0_i32_1 = arith.constant 0 : i32
    return %arg0, %c0_i32, %c0_i32_0 : i32, i32, i32
  }
  func.func @transform_1(%arg0: i32) -> (i32, i32) {
    %c0_i32 = arith.constant 0 : i32
    %c0_i32_0 = arith.constant 0 : i32
    %c0_i32_1 = arith.constant 0 : i32
    return %c0_i32, %c0_i32_0 : i32, i32
  }
  func.func @transform_2(%arg0: i32) -> (i32, i32) {
    %c0_i32 = arith.constant 0 : i32
    %c0_i32_0 = arith.constant 0 : i32
    %c0_i32_1 = arith.constant 0 : i32
    return %c0_i32, %c0_i32_0 : i32, i32
  }
  func.func @transform_3(%arg0: i32) -> (i32, i32, i32) {
    %c0_i32 = arith.constant 0 : i32
    %c0_i32_0 = arith.constant 0 : i32
    %c0_i32_1 = arith.constant 0 : i32
    return %arg0, %c0_i32, %c0_i32_0 : i32, i32, i32
  }
}

</mosaic_0001>

<llo_original>
// kernel: tpu_custom_call.1
$region0: #{tpu_custom_call.1}
  #allocation0 [shape = 'u32[]', space=smem, size = 0x4, offset = 0x4, fixed_abs, tag = 'smem constant byte address 0x4 - core index']
  #allocation1 [shape = 'u32[72,128]{1,0:T(1,128)}', space=vmem, size = 0x9000, scoped, tag = 'internal scratch']
  %s0 = inlined_call_operand.vmem [shape: f32[2,64,16], index: 0, kind: input, shape index: {}]
  %s1 = inlined_call_operand.vmem [shape: f32[16,32], index: 1, kind: input, shape index: {}]
  %s2 = inlined_call_operand.vmem [shape: f32[128,64], index: 2, kind: input, shape index: {}]
  %s3 = inlined_call_operand.vmem [shape: f32[2,128,32], index: 3, kind: output, shape index: {}]
  %s4 = sld [smem:[#allocation0]]
  $region45: #{tpu_custom_call.1} parent=0
    _
  %s6 = ssub.s32 1, %s4
  %s7 = scalar_select 0, %s6, %s4
  loop: start=0, step=1, limit=4
  $region2: #{tpu_custom_call.1} parent=0 // loop_pre_header
    _
  $region3: #{tpu_custom_call.1} parent=0 // loop_header
    %s9 = sphi 0, %s13
    %p10 = scmp.ge.s32.totalorder %s9, 4
    %s19 = sphi 0, %s21
    %s22 = sphi 0, %s19
    %s23 = sphi 0, %s22
    %s39 = sphi 0, %s23
    %s43 = sphi 0, %s43
    %s45 = sphi 0, %s43
    %s46 = sphi 0, %s45
    %s60 = sphi 0, %s46
    %s64 = sphi 0, %s64
    %s66 = sphi 0, %s64
    %s67 = sphi 0, %s66
    %s81 = sphi 0, %s67
    %s87 = sphi 0, %s89
    %s90 = sphi 0, %s87
    %s91 = sphi 0, %s90
    %s107 = sphi 0, %s91
  $region4: #{tpu_custom_call.1} parent=0 // loop_header_branch
    %12 = sbr.rel (%p10) target = $region8
  $region5: #{tpu_custom_call.1} parent=0 // loop_body
    %s14 = ssub.s32 %s9, 1
    %s15 = ssub.s32 %s9, 2
    %s16 = sadd.s32 %s9, 1
    %s17 = ssub.s32 %s9, %s16
    %p18 = scmp.eq.s32.totalorder %s17, 0
    %s20 = sadd.s32 %s19, 1
    %s21 = scalar_select %p18, %s19, %s20
    %p24 = pneg %p18
    %p25 = scmp.eq.s32.totalorder %s9, 1
    %p26 = por %p24, %p25
    %p27 = scmp.ne.s32.totalorder %s19, %s22
    %p28 = scmp.eq.s32.totalorder %s9, 0
    %p29 = por %p27, %p28
    %p30 = scmp.ne.s32.totalorder %s19, %s22
    %p31 = scmp.eq.s32.totalorder %s14, 1
    %p32 = por %p30, %p31
    %p33 = scmp.ne.s32.totalorder %s22, %s23
    %p34 = scmp.eq.s32.totalorder %s14, 0
    %p35 = por %p33, %p34
    %p36 = scmp.ne.s32.totalorder %s22, %s23
    %p37 = scmp.eq.s32.totalorder %s15, 1
    %p38 = por %p36, %p37
    %p40 = scmp.ne.s32.totalorder %s23, %s39
    %p41 = scmp.eq.s32.totalorder %s15, 0
    %p42 = por %p40, %p41
    %s44 = sadd.s32 %s43, 1
    %p47 = scmp.eq.s32.totalorder %s9, 1
    %p48 = scmp.ne.s32.totalorder %s43, %s45
    %p49 = scmp.eq.s32.totalorder %s9, 0
    %p50 = por %p48, %p49
    %p51 = scmp.ne.s32.totalorder %s43, %s45
    %p52 = scmp.eq.s32.totalorder %s14, 1
    %p53 = por %p51, %p52
    %p54 = scmp.ne.s32.totalorder %s45, %s46
    %p55 = scmp.eq.s32.totalorder %s14, 0
    %p56 = por %p54, %p55
    %p57 = scmp.ne.s32.totalorder %s45, %s46
    %p58 = scmp.eq.s32.totalorder %s15, 1
    %p59 = por %p57, %p58
    %p61 = scmp.ne.s32.totalorder %s46, %s60
    %p62 = scmp.eq.s32.totalorder %s15, 0
    %p63 = por %p61, %p62
    %s65 = sadd.s32 %s64, 1
    %p68 = scmp.eq.s32.totalorder %s9, 1
    %p69 = scmp.ne.s32.totalorder %s64, %s66
    %p70 = scmp.eq.s32.totalorder %s9, 0
    %p71 = por %p69, %p70
    %p72 = scmp.ne.s32.totalorder %s64, %s66
    %p73 = scmp.eq.s32.totalorder %s14, 1
    %p74 = por %p72, %p73
    %p75 = scmp.ne.s32.totalorder %s66, %s67
    %p76 = scmp.eq.s32.totalorder %s14, 0
    %p77 = por %p75, %p76
    %p78 = scmp.ne.s32.totalorder %s66, %s67
    %p79 = scmp.eq.s32.totalorder %s15, 1
    %p80 = por %p78, %p79
    %p82 = scmp.ne.s32.totalorder %s67, %s81
    %p83 = scmp.eq.s32.totalorder %s15, 0
    %p84 = por %p82, %p83
    %s85 = ssub.s32 %s9, %s16
    %p86 = scmp.eq.s32.totalorder %s85, 0
    %s88 = sadd.s32 %s87, 1
    %s89 = scalar_select %p86, %s87, %s88
    %p92 = pneg %p86
    %p93 = scmp.eq.s32.totalorder %s9, 1
    %p94 = por %p92, %p93
    %p95 = scmp.ne.s32.totalorder %s87, %s90
    %p96 = scmp.eq.s32.totalorder %s9, 0
    %p97 = por %p95, %p96
    %p98 = scmp.ne.s32.totalorder %s87, %s90
    %p99 = scmp.eq.s32.totalorder %s14, 1
    %p100 = por %p98, %p99
    %p101 = scmp.ne.s32.totalorder %s90, %s91
    %p102 = scmp.eq.s32.totalorder %s14, 0
    %p103 = por %p101, %p102
    %p104 = scmp.ne.s32.totalorder %s90, %s91
    %p105 = scmp.eq.s32.totalorder %s15, 1
    %p106 = por %p104, %p105
    %p108 = scmp.ne.s32.totalorder %s91, %s107
    %p109 = scmp.eq.s32.totalorder %s15, 0
    %p110 = por %p108, %p109
    %p111 = scmp.le.s32.totalorder 1, %s9
    %p112 = scmp.lt.s32.totalorder %s9, 3
    %p113 = pnand %p111, %p112
    %p114 = pneg %p113
    // Predicated region
    $region9: #{tpu_custom_call.1} parent=5 // pred_check
      _
    $region10: #{tpu_custom_call.1} parent=5 // pred_check_branch
      %116 = sbr.rel (%p113) target = $region12
    $region11: #{tpu_custom_call.1} parent=5 // pred_region
      %s117 = ssub.s32 %s9, 1
      // Predicated region
      $region13: #{tpu_custom_call.1} parent=11 // pred_check
        %p118 = pneg %p56
      $region14: #{tpu_custom_call.1} parent=11 // pred_check_branch
        %120 = sbr.rel (%p118) target = $region16
      $region15: #{tpu_custom_call.1} parent=11 // pred_region
        _
      $region16: #{tpu_custom_call.1} parent=11 // pred_fallthru
        _
      // Predicated region
      $region17: #{tpu_custom_call.1} parent=11 // pred_check
        %p121 = pneg %p77
      $region18: #{tpu_custom_call.1} parent=11 // pred_check_branch
        %123 = sbr.rel (%p121) target = $region20
      $region19: #{tpu_custom_call.1} parent=11 // pred_region
        _
      $region20: #{tpu_custom_call.1} parent=11 // pred_fallthru
        _
    $region12: #{tpu_custom_call.1} parent=5 // pred_fallthru
      _
    %p124 = scmp.lt.s32.totalorder %s9, 2
    // Predicated region
    $region21: #{tpu_custom_call.1} parent=5 // pred_check
      %p125 = pneg %p124
    $region22: #{tpu_custom_call.1} parent=5 // pred_check_branch
      %127 = sbr.rel (%p125) target = $region24
    $region23: #{tpu_custom_call.1} parent=5 // pred_region
      // Predicated region
      $region25: #{tpu_custom_call.1} parent=23 // pred_check
        %p128 = pneg %p29
      $region26: #{tpu_custom_call.1} parent=23 // pred_check_branch
        %130 = sbr.rel (%p128) target = $region28
      $region27: #{tpu_custom_call.1} parent=23 // pred_region
        %p131 = scmp.lt.s32.totalorder %s9, 1
        %s132 = scalar_select %p131, %s9, 1
        %s133 = smul.addr %s132, 8
        %s134 = smul.addr %s133, 8
        %s135 = scalar_lea.vmem %s0, %s134
      $region28: #{tpu_custom_call.1} parent=23 // pred_fallthru
        _
    $region24: #{tpu_custom_call.1} parent=5 // pred_fallthru
      _
    %p136 = scmp.le.s32.totalorder 1, %s9
    %p137 = scmp.lt.s32.totalorder %s9, 3
    %p138 = pnand %p136, %p137
    %p139 = pneg %p138
    // Predicated region
    $region29: #{tpu_custom_call.1} parent=5 // pred_check
      _
    $region30: #{tpu_custom_call.1} parent=5 // pred_check_branch
      %141 = sbr.rel (%p138) target = $region32
    $region31: #{tpu_custom_call.1} parent=5 // pred_region
      %s142 = ssub.s32 %s9, 1
      %p143 = scmp.lt.s32.totalorder %s14, 1
      %s144 = scalar_select %p143, %s14, 1
      %s145 = smul.addr %s144, 8
      %s146 = smul.addr %s145, 8
      %s147 = scalar_lea.vmem %s0, %s146
      %p148 = pneg %p35
      %p149 = pneg %p32
      %p150 = pneg %p56
      %p151 = pneg %p53
      %p152 = pneg %p77
      %p153 = pneg %p74
      %p154 = pneg %p103
      %p155 = pneg %p100
      %p156 = scmp.lt.s32.totalorder %s14, 1
      %s157 = scalar_select %p156, %s14, 1
      %s158 = smul.addr %s157, 16
      %s159 = smul.addr %s158, 8
      %s160 = scalar_lea.vmem %s3, %s159
      %p161 = scmp.lt.s32.totalorder %s14, 1
      %s162 = scalar_select %p161, %s14, 1
      %s163 = smul.addr %s162, 8
      %s164 = smul.addr %s163, 8
      %s165 = scalar_lea.vmem %s0, %s164
      %p166 = scmp.lt.s32.totalorder %s14, 1
      %s167 = scalar_select %p166, %s14, 1
      %s168 = smul.addr %s167, 16
      %s169 = smul.addr %s168, 8
      %s170 = scalar_lea.vmem %s3, %s169
      %v171 = vld [vmem:[%s165] sm:$0xff]
      %v172 = vld [vmem:[%s165 + $0x8] sm:$0xff]
      %v173 = vld [vmem:[%s165 + $0x10] sm:$0xff]
      %v174 = vld [vmem:[%s165 + $0x18] sm:$0xff]
      %v175 = vld [vmem:[%s165 + $0x20] sm:$0xff]
      %v176 = vld [vmem:[%s165 + $0x28] sm:$0xff]
      %v177 = vld [vmem:[%s165 + $0x30] sm:$0xff]
      %v178 = vld [vmem:[%s165 + $0x38] sm:$0xff]
      %v179 = vld [vmem:[%s1] sm:$0xff]
      %v180 = vld [vmem:[%s1 + $0x8] sm:$0xff]
      %vm181 = vcmask 130048
      %v183 = vsel %vm181, %v171, 0
      %v186 = vsel %vm181, %v172, 0
      %v189 = vsel %vm181, %v173, 0
      %v192 = vsel %vm181, %v174, 0
      %v195 = vsel %vm181, %v175, 0
      %v198 = vsel %vm181, %v176, 0
      %v201 = vsel %vm181, %v177, 0
      %v204 = vsel %vm181, %v178, 0
      %206 = vmatpush.msra.mxu0 0.0
      %207 = vmatpush.msra.mxu0 0.0
      %208 = vmatpush.msra.mxu0 0.0
      %209 = vmatpush.msra.mxu0 0.0
      %210 = vmatpush.msra.mxu0 0.0
      %211 = vmatpush.msra.mxu0 0.0
      %212 = vmatpush.msra.mxu0 0.0
      %213 = vmatpush.msra.mxu0 0.0
      %214 = vmatpush.msra.mxu0 0.0
      %215 = vmatpush.msra.mxu0 0.0
      %216 = vmatpush.msra.mxu0 0.0
      %217 = vmatpush.msra.mxu0 0.0
      %218 = vmatpush.msra.mxu0 0.0
      %219 = vmatpush.msra.mxu0 0.0
      %220 = vmatpush.msra.mxu0 %v180
      %221 = vmatpush.msra.mxu0 %v179
      %222 = vmatmul.f32.gmra.mxu0 %v183
      %v223 = vpop.f32.mrf.mxu0
      %v224 = vadd.f32 0.0, %v223
      %225 = vmatmul.f32.gmra.mxu0 %v186
      %v226 = vpop.f32.mrf.mxu0
      %v227 = vadd.f32 0.0, %v226
      %228 = vmatmul.f32.gmra.mxu0 %v189
      %v229 = vpop.f32.mrf.mxu0
      %v230 = vadd.f32 0.0, %v229
      %231 = vmatmul.f32.gmra.mxu0 %v192
      %v232 = vpop.f32.mrf.mxu0
      %v233 = vadd.f32 0.0, %v232
      %234 = vmatmul.f32.gmra.mxu0 %v195
      %v235 = vpop.f32.mrf.mxu0
      %v236 = vadd.f32 0.0, %v235
      %237 = vmatmul.f32.gmra.mxu0 %v198
      %v238 = vpop.f32.mrf.mxu0
      %v239 = vadd.f32 0.0, %v238
      %240 = vmatmul.f32.gmra.mxu0 %v201
      %v241 = vpop.f32.mrf.mxu0
      %v242 = vadd.f32 0.0, %v241
      %243 = vmatmul.f32.gmra.mxu0 %v204
      %v244 = vpop.f32.mrf.mxu0
      %v245 = vadd.f32 0.0, %v244
      %246 = vdwg.mxu0
      %v247 = vld [vmem:[%s2] sm:$0xff]
      %v248 = vld [vmem:[%s2 + $0x8] sm:$0xff]
      %v249 = vld [vmem:[%s2 + $0x10] sm:$0xff]
      %v250 = vld [vmem:[%s2 + $0x18] sm:$0xff]
      %v251 = vld [vmem:[%s2 + $0x20] sm:$0xff]
      %v252 = vld [vmem:[%s2 + $0x28] sm:$0xff]
      %v253 = vld [vmem:[%s2 + $0x30] sm:$0xff]
      %v254 = vld [vmem:[%s2 + $0x38] sm:$0xff]
      %v255 = vld [vmem:[%s2 + $0x40] sm:$0xff]
      %v256 = vld [vmem:[%s2 + $0x48] sm:$0xff]
      %v257 = vld [vmem:[%s2 + $0x50] sm:$0xff]
      %v258 = vld [vmem:[%s2 + $0x58] sm:$0xff]
      %v259 = vld [vmem:[%s2 + $0x60] sm:$0xff]
      %v260 = vld [vmem:[%s2 + $0x68] sm:$0xff]
      %v261 = vld [vmem:[%s2 + $0x70] sm:$0xff]
      %v262 = vld [vmem:[%s2 + $0x78] sm:$0xff]
      %vm263 = vcmask 523264
      %v265 = vsel %vm263, %v247, 0
      %v268 = vsel %vm263, %v248, 0
      %v271 = vsel %vm263, %v249, 0
      %v274 = vsel %vm263, %v250, 0
      %v277 = vsel %vm263, %v251, 0
      %v280 = vsel %vm263, %v252, 0
      %v283 = vsel %vm263, %v253, 0
      %v286 = vsel %vm263, %v254, 0
      %v289 = vsel %vm263, %v255, 0
      %v292 = vsel %vm263, %v256, 0
      %v295 = vsel %vm263, %v257, 0
      %v298 = vsel %vm263, %v258, 0
      %v301 = vsel %vm263, %v259, 0
      %v304 = vsel %vm263, %v260, 0
      %v307 = vsel %vm263, %v261, 0
      %v310 = vsel %vm263, %v262, 0
      %312 = vmatpush.msra.mxu0 0.0
      %313 = vmatpush.msra.mxu0 0.0
      %314 = vmatpush.msra.mxu0 0.0
      %315 = vmatpush.msra.mxu0 0.0
      %316 = vmatpush.msra.mxu0 0.0
      %317 = vmatpush.msra.mxu0 0.0
      %318 = vmatpush.msra.mxu0 0.0
      %319 = vmatpush.msra.mxu0 0.0
      %320 = vmatpush.msra.mxu0 %v245
      %321 = vmatpush.msra.mxu0 %v242
      %322 = vmatpush.msra.mxu0 %v239
      %323 = vmatpush.msra.mxu0 %v236
      %324 = vmatpush.msra.mxu0 %v233
      %325 = vmatpush.msra.mxu0 %v230
      %326 = vmatpush.msra.mxu0 %v227
      %327 = vmatpush.msra.mxu0 %v224
      %328 = vmatmul.f32.gmra.mxu0 %v265
      %v329 = vpop.f32.mrf.mxu0
      %v330 = vadd.f32 0.0, %v329
      %331 = vmatmul.f32.gmra.mxu0 %v268
      %v332 = vpop.f32.mrf.mxu0
      %v333 = vadd.f32 0.0, %v332
      %334 = vmatmul.f32.gmra.mxu0 %v271
      %v335 = vpop.f32.mrf.mxu0
      %v336 = vadd.f32 0.0, %v335
      %337 = vmatmul.f32.gmra.mxu0 %v274
      %v338 = vpop.f32.mrf.mxu0
      %v339 = vadd.f32 0.0, %v338
      %340 = vmatmul.f32.gmra.mxu0 %v277
      %v341 = vpop.f32.mrf.mxu0
      %v342 = vadd.f32 0.0, %v341
      %343 = vmatmul.f32.gmra.mxu0 %v280
      %v344 = vpop.f32.mrf.mxu0
      %v345 = vadd.f32 0.0, %v344
      %346 = vmatmul.f32.gmra.mxu0 %v283
      %v347 = vpop.f32.mrf.mxu0
      %v348 = vadd.f32 0.0, %v347
      %349 = vmatmul.f32.gmra.mxu0 %v286
      %v350 = vpop.f32.mrf.mxu0
      %v351 = vadd.f32 0.0, %v350
      %352 = vmatmul.f32.gmra.mxu0 %v289
      %v353 = vpop.f32.mrf.mxu0
      %v354 = vadd.f32 0.0, %v353
      %355 = vmatmul.f32.gmra.mxu0 %v292
      %v356 = vpop.f32.mrf.mxu0
      %v357 = vadd.f32 0.0, %v356
      %358 = vmatmul.f32.gmra.mxu0 %v295
      %v359 = vpop.f32.mrf.mxu0
      %v360 = vadd.f32 0.0, %v359
      %361 = vmatmul.f32.gmra.mxu0 %v298
      %v362 = vpop.f32.mrf.mxu0
      %v363 = vadd.f32 0.0, %v362
      %364 = vmatmul.f32.gmra.mxu0 %v301
      %v365 = vpop.f32.mrf.mxu0
      %v366 = vadd.f32 0.0, %v365
      %367 = vmatmul.f32.gmra.mxu0 %v304
      %v368 = vpop.f32.mrf.mxu0
      %v369 = vadd.f32 0.0, %v368
      %370 = vmatmul.f32.gmra.mxu0 %v307
      %v371 = vpop.f32.mrf.mxu0
      %v372 = vadd.f32 0.0, %v371
      %373 = vmatmul.f32.gmra.mxu0 %v310
      %v374 = vpop.f32.mrf.mxu0
      %v375 = vadd.f32 0.0, %v374
      %376 = vdwg.mxu0
      %vm377 = vcmask 261120
      %378 = vst.msk [vmem:[%s170] sm:$0xff] %vm377, %v330
      %379 = vst.msk [vmem:[%s170 + $0x8] sm:$0xff] %vm377, %v333
      %380 = vst.msk [vmem:[%s170 + $0x10] sm:$0xff] %vm377, %v336
      %381 = vst.msk [vmem:[%s170 + $0x18] sm:$0xff] %vm377, %v339
      %382 = vst.msk [vmem:[%s170 + $0x20] sm:$0xff] %vm377, %v342
      %383 = vst.msk [vmem:[%s170 + $0x28] sm:$0xff] %vm377, %v345
      %384 = vst.msk [vmem:[%s170 + $0x30] sm:$0xff] %vm377, %v348
      %385 = vst.msk [vmem:[%s170 + $0x38] sm:$0xff] %vm377, %v351
      %386 = vst.msk [vmem:[%s170 + $0x40] sm:$0xff] %vm377, %v354
      %387 = vst.msk [vmem:[%s170 + $0x48] sm:$0xff] %vm377, %v357
      %388 = vst.msk [vmem:[%s170 + $0x50] sm:$0xff] %vm377, %v360
      %389 = vst.msk [vmem:[%s170 + $0x58] sm:$0xff] %vm377, %v363
      %390 = vst.msk [vmem:[%s170 + $0x60] sm:$0xff] %vm377, %v366
      %391 = vst.msk [vmem:[%s170 + $0x68] sm:$0xff] %vm377, %v369
      %392 = vst.msk [vmem:[%s170 + $0x70] sm:$0xff] %vm377, %v372
      %393 = vst.msk [vmem:[%s170 + $0x78] sm:$0xff] %vm377, %v375
      %p394 = scmp.lt.s32.totalorder %s14, 1
      %s395 = scalar_select %p394, %s14, 1
      %s396 = smul.addr %s395, 16
      %s397 = smul.addr %s396, 8
      %s398 = scalar_lea.vmem %s3, %s397
      // Predicated region
      $region33: #{tpu_custom_call.1} parent=31 // pred_check
        %p399 = pneg %p100
      $region34: #{tpu_custom_call.1} parent=31 // pred_check_branch
        %401 = sbr.rel (%p399) target = $region36
      $region35: #{tpu_custom_call.1} parent=31 // pred_region
        _
      $region36: #{tpu_custom_call.1} parent=31 // pred_fallthru
        _
    $region32: #{tpu_custom_call.1} parent=5 // pred_fallthru
      _
    %p402 = scmp.le.s32.totalorder 2, %s9
    // Predicated region
    $region37: #{tpu_custom_call.1} parent=5 // pred_check
      %p403 = pneg %p402
    $region38: #{tpu_custom_call.1} parent=5 // pred_check_branch
      %405 = sbr.rel (%p403) target = $region40
    $region39: #{tpu_custom_call.1} parent=5 // pred_region
      %s406 = ssub.s32 %s9, 2
      // Predicated region
      $region41: #{tpu_custom_call.1} parent=39 // pred_check
        %p407 = pneg %p106
      $region42: #{tpu_custom_call.1} parent=39 // pred_check_branch
        %409 = sbr.rel (%p407) target = $region44
      $region43: #{tpu_custom_call.1} parent=39 // pred_region
        %p410 = scmp.lt.s32.totalorder %s15, 1
        %s411 = scalar_select %p410, %s15, 1
        %s412 = smul.addr %s411, 16
        %s413 = smul.addr %s412, 8
        %s414 = scalar_lea.vmem %s3, %s413
      $region44: #{tpu_custom_call.1} parent=39 // pred_fallthru
        _
    $region40: #{tpu_custom_call.1} parent=5 // pred_fallthru
      _
  $region6: #{tpu_custom_call.1} parent=0 // loop_footer
    %s13 = sadd.s32 1, %s9
  $region7: #{tpu_custom_call.1} parent=0 // loop_footer_branch
    %8 = sbr.rel target = $region3
  $region8: #{tpu_custom_call.1} parent=0 // loop_exit
    _

</llo_original>
